<compile_context>
chip_gen: v7x
topology: tpu7x:2x2x1
jax: 0.10.0
libtpu: 0.0.40
codegen_flags: <defaults>
</compile_context>

<pallas_src>
import jax
import jax.numpy as jnp
from jax.experimental import pallas as pl
from jax.experimental.pallas import tpu as pltpu


_MAX_LANES = 256 * 128          # widen the lane axis up to 32768 elements
_N_INFLIGHT = 4                 # DMA chunks kept in flight simultaneously
_MIN_CHUNK_BYTES = 512 * 1024   # do not split slabs into chunks smaller than this


def _sublane_multiple(dtype):
    """Native sublane packing for the dtype: 8 x f32, 16 x bf16, 32 x int8."""
    itemsize = jnp.dtype(dtype).itemsize
    return {1: 32, 2: 16}.get(itemsize, 8)


def _choose_lanes(total):
    """Largest k*128 <= _MAX_LANES that evenly divides `total` (None if n/a)."""
    if total <= 0 or total % 128 != 0:
        return None
    max_k = min(total // 128, _MAX_LANES // 128)   # bounded: <= 256 iterations
    for k in range(max_k, 0, -1):
        lanes = k * 128
        if total % lanes == 0:
            return lanes
    return None


def _chunk_bounds(rows, lanes, dtype):
    """Static (start, size) row ranges: up to _N_INFLIGHT sublane-aligned chunks."""
    itemsize = jnp.dtype(dtype).itemsize
    sub = _sublane_multiple(dtype)
    total_bytes = rows * lanes * itemsize
    n = max(1, min(_N_INFLIGHT, total_bytes // _MIN_CHUNK_BYTES, rows))
    base = -(-rows // n)                      # ceil-div rows over n chunks
    base = -(-base // sub) * sub              # round up to the sublane multiple
    bounds = []
    start = 0
    while start < rows:
        size = min(base, rows - start)        # last chunk may be ragged (static)
        bounds.append((start, size))
        start += size
    return bounds


def _make_dma_copy_kernel(chunk_bounds):
    """Kernel: HBM->HBM identity copy via async DMA, all chunks in flight."""

    def kernel(x_hbm, o_hbm, sem):
        copies = []
        for i, (start, size) in enumerate(chunk_bounds):   # static unroll (<= 4)
            cp = pltpu.make_async_copy(
                x_hbm.at[pl.ds(start, size), :],
                o_hbm.at[pl.ds(start, size), :],
                sem.at[i],
            )
            cp.start()
            copies.append(cp)
        for cp in copies:
            cp.wait()

    return kernel


def _pallas_identity_copy(flat_2d):
    """Identity copy of a lane-dense [rows, lanes] slab as pure HBM->HBM DMA."""
    rows, lanes = flat_2d.shape
    itemsize = jnp.dtype(flat_2d.dtype).itemsize
    bounds = _chunk_bounds(rows, lanes, flat_2d.dtype)

    return pl.pallas_call(
        _make_dma_copy_kernel(bounds),
        out_shape=jax.ShapeDtypeStruct((rows, lanes), flat_2d.dtype),
        in_specs=[pl.BlockSpec(memory_space=pl.ANY)],
        out_specs=pl.BlockSpec(memory_space=pl.ANY),
        scratch_shapes=[pltpu.SemaphoreType.DMA((len(bounds),))],
        cost_estimate=pl.CostEstimate(
            flops=0,
            transcendentals=0,
            bytes_accessed=2 * rows * lanes * itemsize,
        ),
    )(flat_2d)


class View:
    """JAX/Pallas equivalent of the PyTorch View module.

    For production Dreamer training set use_pallas_copy=False: a reshape of a
    contiguous array is metadata-only and compiles to a (near) no-op in XLA;
    the Pallas DMA copy exists only to exercise a kernel for this module.
    """

    def __init__(self, shape, use_pallas_copy=True):
        self.shape = tuple(shape)
        self.use_pallas_copy = use_pallas_copy

    def _resolve_shape(self, total):
        # torch .view semantics: at most one -1, inferred from the total size.
        shape = list(self.shape)
        if shape.count(-1) > 1:
            raise ValueError("View: at most one dimension may be -1")
        known = 1
        for s in shape:
            if s != -1:
                known *= s
        if -1 in shape:
            if known == 0 or total % known != 0:
                raise ValueError(
                    f"View: cannot reshape {total} elements into {self.shape}")
            shape[shape.index(-1)] = total // known
        elif known != total:
            raise ValueError(
                f"View: cannot reshape {total} elements into {self.shape}")
        return tuple(shape)

    def __call__(self, x):
        total = int(x.size)
        shape = self._resolve_shape(total)

        if not self.use_pallas_copy:
            return jnp.reshape(x, shape)

        lanes = _choose_lanes(total)
        if lanes is None:
            # Not a multiple of 128 lanes: zero-copy reshape (no pad/slice path).
            return jnp.reshape(x, shape)

        flat_2d = jnp.reshape(x, (total // lanes, lanes))
        copied = _pallas_identity_copy(flat_2d)
        return jnp.reshape(copied, shape)


if __name__ == "__main__":
    root = jax.random.PRNGKey(0)
    k0, k1, k2, k3 = jax.random.split(root, 4)

    # 1) typical Dreamer usage: flatten conv feature maps (NCHW) -> (N, C*H*W)
    x = jax.random.normal(k0, (2, 4, 16, 16), dtype=jnp.float32)
    view = View((2, -1))                      # -> (2, 1024)
    out = jax.block_until_ready(view(x))
    ref = jnp.reshape(x, (2, -1))
    assert out.shape == (2, 1024), out.shape
    assert out.dtype == x.dtype
    assert bool(jnp.all(out == ref))

    # 2) bf16 path (dtype-aware sublane alignment, wide lane slab)
    xb = jax.random.normal(k1, (4, 8, 16, 16), dtype=jnp.bfloat16)
    vb = View((-1, 256))
    outb = jax.block_until_ready(vb(xb))
    refb = jnp.reshape(xb, (-1, 256))
    assert outb.shape == refb.shape and outb.dtype == xb.dtype
    assert bool(jnp.all(outb == refb))

    # 3) size not a multiple of 128: zero-copy reshape fallback (no pad/slice)
    xc = jax.random.normal(k2, (3, 5, 7), dtype=jnp.float32)
    vc = View((-1,))
    outc = jax.block_until_ready(vc(xc))
    assert bool(jnp.all(outc == jnp.reshape(xc, (-1,))))

    # 4) larger slab: exercises the multi-chunk in-flight DMA path
    xd = jax.random.normal(k3, (64, 128, 64), dtype=jnp.float32)   # 2 MiB
    vd = View((64, -1))
    outd = jax.block_until_ready(vd(xd))
    refd = jnp.reshape(xd, (64, -1))
    assert outd.shape == refd.shape and outd.dtype == xd.dtype
    assert bool(jnp.all(outd == refd))

    print("KERNEL_OK")
</pallas_src>

<mosaic_0001>
module attributes {stable_mosaic.version = 11 : i64} {
  func.func @kernel(%arg0: memref<1x2048xf32, #tpu.memory_space<any>>, %arg1: memref<1x2048xf32, #tpu.memory_space<any>>, %arg2: memref<1x!tpu.dma_semaphore, #tpu.memory_space<semaphore_mem>>) attributes {dimension_semantics = [], scalar_prefetch = 0 : i64, scratch_operands = 1 : i64, tpu.core_type = #tpu.core_type<tc>} {
    %c0_i32 = arith.constant 0 : i32
    %c0_i32_0 = arith.constant 0 : i32
    %c0_i32_1 = arith.constant 0 : i32
    %0 = tpu.memref_slice %arg0[%c0_i32_0, %c0_i32_1] : memref<1x2048xf32, #tpu.memory_space<any>> -> memref<1x2048xf32, #tpu.memory_space<any>>
    %c0_i32_2 = arith.constant 0 : i32
    %c0_i32_3 = arith.constant 0 : i32
    %1 = tpu.memref_slice %arg1[%c0_i32_2, %c0_i32_3] : memref<1x2048xf32, #tpu.memory_space<any>> -> memref<1x2048xf32, #tpu.memory_space<any>>
    %2 = tpu.memref_slice %arg2[%c0_i32] : memref<1x!tpu.dma_semaphore, #tpu.memory_space<semaphore_mem>> -> memref<1x!tpu.dma_semaphore, #tpu.memory_space<semaphore_mem>>
    %3 = tpu.memref_squeeze %2 : memref<1x!tpu.dma_semaphore, #tpu.memory_space<semaphore_mem>> -> memref<!tpu.dma_semaphore, #tpu.memory_space<semaphore_mem>>
    tpu.enqueue_dma source(%0 : memref<1x2048xf32, #tpu.memory_space<any>>) target(%1 : memref<1x2048xf32, #tpu.memory_space<any>>) target_semaphore(%3 : memref<!tpu.dma_semaphore, #tpu.memory_space<semaphore_mem>>)
    %c0_i32_4 = arith.constant 0 : i32
    %c0_i32_5 = arith.constant 0 : i32
    %c0_i32_6 = arith.constant 0 : i32
    %4 = tpu.memref_slice %arg0[%c0_i32_5, %c0_i32_6] : memref<1x2048xf32, #tpu.memory_space<any>> -> memref<1x2048xf32, #tpu.memory_space<any>>
    %c0_i32_7 = arith.constant 0 : i32
    %c0_i32_8 = arith.constant 0 : i32
    %5 = tpu.memref_slice %arg1[%c0_i32_7, %c0_i32_8] : memref<1x2048xf32, #tpu.memory_space<any>> -> memref<1x2048xf32, #tpu.memory_space<any>>
    %6 = tpu.memref_slice %arg2[%c0_i32_4] : memref<1x!tpu.dma_semaphore, #tpu.memory_space<semaphore_mem>> -> memref<1x!tpu.dma_semaphore, #tpu.memory_space<semaphore_mem>>
    %7 = tpu.memref_squeeze %6 : memref<1x!tpu.dma_semaphore, #tpu.memory_space<semaphore_mem>> -> memref<!tpu.dma_semaphore, #tpu.memory_space<semaphore_mem>>
    tpu.wait_dma2 semaphore(%7 : memref<!tpu.dma_semaphore, #tpu.memory_space<semaphore_mem>>) src(%4 : memref<1x2048xf32, #tpu.memory_space<any>>) dst(%5 : memref<1x2048xf32, #tpu.memory_space<any>>)
    return
  }
}

</mosaic_0001>

<llo_original>
// kernel: tpu_custom_call.1
$region0: #{tpu_custom_call.1}
  #allocation0 [shape = 'u32[]', space=smem, size = 0x4, offset = 0x4, fixed_abs, tag = 'smem constant byte address 0x4 - core index']
  #allocation1 [shape = 'u32[144,128]{1,0:T(1,128)}', space=vmem, size = 0x12000, scoped, tag = 'internal scratch']
  #allocation2 [shape = 's32[1]{0}', space=sflag, size = 0x4, scoped, tag = 'scratch operand']
  #allocation3 [shape = 's32[]', space=sflag, size = 0x4, offset = 0, fixed_abs, tag = 'sflag constant byte address 0x0 - dummy sync flag']
  #allocation4 [shape = 'u32[0]{0}', space=smem, size = 0, offset = 0, fixed_abs, tag = 'smem constant byte address 0x0 - null']
  %s0 = inlined_call_operand.hbm [shape: f32[1,2048], index: 0, kind: input, shape index: {}]
  %s1 = inlined_call_operand.hbm [shape: f32[1,2048], index: 1, kind: output, shape index: {}]
  %s2 = sld [smem:[#allocation0]]
  $region2: #{tpu_custom_call.1} parent=0
    _
  %s4 = ssub.s32 1, %s2
  %s5 = scalar_select 0, %s4, %s2
  %s7 = sshll.u32 1, 14
  %s8 = sxor.u32 4294967295, %s7
  %s11 = sshll.u32 3, 24
  %s12 = sxor.u32 4294967295, %s11
  %s13 = sand.u32 0, %s12
  %s15 = sor.u32 %s13, 0
  %18 = dma.general %s0, 256, %s1, [#allocation2], [#allocation3], [#allocation4], %s15, 0
  %s19 = smul.u32 1, 16
  %s20 = sshll.u32 %s19, 4
  %21 = dma.done [#allocation2], %s20
  %22 = vsyncmov [#allocation2]
  %s23 = vpop.sfrf %22
  %p24 = scmp.eq.s32.totalorder %s23, 0
  %p25 = pneg %p24
  %27 = shalt.err (%p25)

</llo_original>
